<compile_context>
chip_gen: v6e
topology: v6e:2x2x1
jax: 0.10.0
libtpu: 0.0.40
codegen_flags: <defaults>
</compile_context>

<pallas_src>
import jax
import jax.numpy as jnp
from jax.experimental import pallas as pl
from jax.experimental.pallas import tpu as pltpu

LANES = 128


def _mish_kernel(x_ref, o_ref):
    x = x_ref[...]
    xf = x.astype(jnp.float32)
    # tanh(softplus(x)) = ((1+e)^2 - 1) / ((1+e)^2 + 1) = (e^2 + 2e) / (e^2 + 2e + 2)
    # e = exp(min(x, 20)) keeps exp finite; for x >= ~17 the ratio is 1.0f,
    # which matches PyTorch's softplus threshold=20 composed with tanh saturation.
    e = jnp.exp(jnp.minimum(xf, 20.0))
    t = e * e + 2.0 * e
    y = xf * (t / (t + 2.0))
    o_ref[...] = y.astype(o_ref.dtype)


def mish(x: jax.Array, *, block_rows: int = 4096) -> jax.Array:
    """Elementwise mish; x may be any shape / float dtype (e.g. NCHW)."""
    assert block_rows % 32 == 0, "block_rows must be a multiple of 32 (dtype packing)"
    orig_shape = x.shape
    orig_dtype = x.dtype

    flat = x.reshape(-1)
    n = flat.shape[0]

    # Pad only to a multiple of LANES (128) when needed.  For typical conv
    # feature maps n is already lane-aligned and this path is copy-free.
    rows = pl.cdiv(n, LANES)
    n_pad = rows * LANES
    if n_pad != n:
        flat = jnp.pad(flat, (0, n_pad - n))
    x2d = flat.reshape(rows, LANES)

    # Exact-fit single block for small inputs (block == full array dims is
    # always legal); otherwise 4096-row (2 MiB f32) blocks with a ragged
    # last block handled by the Pallas pipeline (OOB stores dropped).
    br = rows if rows <= block_rows else block_rows
    grid = (pl.cdiv(rows, br),)

    itemsize = jnp.dtype(orig_dtype).itemsize
    cost = pl.CostEstimate(
        flops=6 * n_pad,
        transcendentals=n_pad,
        bytes_accessed=2 * n_pad * itemsize,
    )

    out2d = pl.pallas_call(
        _mish_kernel,
        out_shape=jax.ShapeDtypeStruct((rows, LANES), orig_dtype),
        grid_spec=pltpu.PrefetchScalarGridSpec(
            num_scalar_prefetch=0,
            grid=grid,
            in_specs=[pl.BlockSpec((br, LANES), lambda i: (i, 0))],
            out_specs=pl.BlockSpec((br, LANES), lambda i: (i, 0)),
        ),
        compiler_params=pltpu.CompilerParams(
            dimension_semantics=("parallel",),
        ),
        cost_estimate=cost,
    )(x2d)

    out = out2d.reshape(-1)
    if n_pad != n:
        out = out[:n]
    return out.reshape(orig_shape)


def _mish_ref(x):
    # Pure-JAX reference with literal PyTorch softplus semantics
    # (beta=1, threshold=20) followed by tanh.
    xf = x.astype(jnp.float32)
    sp = jnp.where(xf > 20.0, xf, jnp.log1p(jnp.exp(jnp.minimum(xf, 20.0))))
    return (xf * jnp.tanh(sp)).astype(x.dtype)


if __name__ == "__main__":
    key = jax.random.PRNGKey(0)

    # NCHW, consistent with conv-style inputs of the TSRN module.
    x = jax.random.normal(key, (2, 4, 16, 16), dtype=jnp.float32) * 3.0
    y = mish(x)
    jax.block_until_ready(y)
    y_ref = _mish_ref(x)
    assert y.shape == x.shape and y.dtype == x.dtype
    assert jnp.allclose(y, y_ref, atol=1e-5, rtol=1e-5)

    # Ragged (non-128-multiple) shape exercises the pad/slice fallback path
    # and includes values across the softplus threshold.
    x2 = jax.random.normal(jax.random.PRNGKey(1), (2, 3, 7, 9), dtype=jnp.float32) * 12.0
    y2 = mish(x2)
    jax.block_until_ready(y2)
    assert jnp.allclose(y2, _mish_ref(x2), atol=1e-5, rtol=1e-5)

    print("KERNEL_OK")
</pallas_src>

<mosaic_0001>
module attributes {stable_mosaic.version = 11 : i64} {
  func.func @_mish_kernel(%arg0: i32, %arg1: memref<16x128xf32, #tpu.memory_space<vmem>>, %arg2: memref<16x128xf32, #tpu.memory_space<vmem>>) attributes {dimension_semantics = [#tpu.dimension_semantics<parallel>], iteration_bounds = array<i64: 1>, scalar_prefetch = 0 : i64, scratch_operands = 0 : i64, tpu.core_type = #tpu.core_type<tc>, window_params = [{transform_indices = @transform_0, window_bounds = array<i64: 16, 128>}, {transform_indices = @transform_1, window_bounds = array<i64: 16, 128>}]} {
    %c0 = arith.constant 0 : index
    %c0_0 = arith.constant 0 : index
    %0 = vector.load %arg1[%c0, %c0_0] : memref<16x128xf32, #tpu.memory_space<vmem>>, vector<16x128xf32>
    %cst = arith.constant 2.000000e+01 : f32
    %1 = vector.broadcast %cst : f32 to vector<16x128xf32>
    %2 = arith.minimumf %0, %1 : vector<16x128xf32>
    %3 = math.exp %2 : vector<16x128xf32>
    %4 = arith.mulf %3, %3 : vector<16x128xf32>
    %cst_1 = arith.constant 2.000000e+00 : f32
    %5 = vector.broadcast %cst_1 : f32 to vector<16x128xf32>
    %6 = arith.mulf %5, %3 : vector<16x128xf32>
    %7 = arith.addf %4, %6 : vector<16x128xf32>
    %cst_2 = arith.constant 2.000000e+00 : f32
    %8 = vector.broadcast %cst_2 : f32 to vector<16x128xf32>
    %9 = arith.addf %7, %8 : vector<16x128xf32>
    %10 = arith.divf %7, %9 : vector<16x128xf32>
    %11 = arith.mulf %0, %10 : vector<16x128xf32>
    %c0_3 = arith.constant 0 : index
    %c0_4 = arith.constant 0 : index
    %12 = vector.load %arg2[%c0_3, %c0_4] : memref<16x128xf32, #tpu.memory_space<vmem>>, vector<16x128xf32>
    tpu.vector_store %arg2[%c0_3, %c0_4], %11 {strides = array<i32>} : memref<16x128xf32, #tpu.memory_space<vmem>>, vector<16x128xf32>,
    return
  }
  func.func @transform_0(%arg0: i32) -> (i32, i32) {
    %c0_i32 = arith.constant 0 : i32
    %c0_i32_0 = arith.constant 0 : i32
    return %arg0, %c0_i32 : i32, i32
  }
  func.func @transform_1(%arg0: i32) -> (i32, i32) {
    %c0_i32 = arith.constant 0 : i32
    %c0_i32_0 = arith.constant 0 : i32
    return %arg0, %c0_i32 : i32, i32
  }
}

</mosaic_0001>

<llo_original>
// kernel: tpu_custom_call.1
$region0: #{tpu_custom_call.1}
  #allocation0 [shape = 'u32[]', space=smem, size = 0x4, offset = 0x4, fixed_abs, tag = 'smem constant byte address 0x4 - core index']
  #allocation1 [shape = 'u32[144,128]{1,0:T(1,128)}', space=vmem, size = 0x12000, scoped, tag = 'internal scratch']
  %s0 = inlined_call_operand.hbm [shape: f32[16,128], index: 0, kind: input, shape index: {}]
  %s1 = inlined_call_operand.hbm [shape: f32[16,128], index: 1, kind: output, shape index: {}]
  %s2 = sld [smem:[#allocation0]]
  $region18: #{tpu_custom_call.1} parent=0
    _
  %s4 = ssub.s32 1, %s2
  %s5 = scalar_select 0, %s4, %s2
  $region1: #{tpu_custom_call.1} parent=0
    #allocation2 [shape = 'u8[8192]{0}', space=vmem, size = 0x2000, scoped, tag = 'input window, operand 0, single buffered']
    #allocation3 [shape = 's32[1]{0}', space=sflag, size = 0x4, scoped, tag = 'scoped memory for tpu_custom_call.1']
    #allocation4 [shape = 's32[1]{0}', space=sflag, size = 0x4, scoped, tag = 'scoped memory for tpu_custom_call.1']
    #allocation5 [shape = 'u8[8192]{0}', space=vmem, size = 0x2000, scoped, tag = 'output window, operand 0, single buffered']
    %6 = vsyncpa [#allocation3], 0
    %7 = vsyncpa [#allocation4], 0
    // Predicated region
    $region2: #{tpu_custom_call.1} parent=1 // pred_check
      _
    $region3: #{tpu_custom_call.1} parent=1 // pred_check_branch
      %9 = sbr.rel (0) target = $region5
    $region4: #{tpu_custom_call.1} parent=1 // pred_region
      %s11 = ssub.s32 256, 256
      %12 = vsyncadd [#allocation3], %s11
      %s13 = sshll.u32 [#allocation2], 4
      %s14 = int_to_ptr.vmem [resolvable:$true] %s13
      %19 = dma.hbm_to_vmem [thread:$0]  %s0, 256, %s14, [#allocation3], 128, 128, 8
    $region5: #{tpu_custom_call.1} parent=1 // pred_fallthru
      _
    // Predicated region
    $region6: #{tpu_custom_call.1} parent=1 // pred_check
      _
    $region7: #{tpu_custom_call.1} parent=1 // pred_check_branch
      %21 = sbr.rel (0) target = $region9
    $region8: #{tpu_custom_call.1} parent=1 // pred_region
      %22 = dma.done [#allocation3], 256
    $region9: #{tpu_custom_call.1} parent=1 // pred_fallthru
      _
    %v23 = vld [vmem:[#allocation2] sm:$0xff]
    %v24 = vld [vmem:[#allocation2 + $0x8] sm:$0xff]
    %v25 = vmin.f32 %v23, 20.0
    %v26 = vmin.f32 %v24, 20.0
    %v27 = vmul.f32 %v25, 1.442695
    %v28 = vpow.pop %v27
    %v29 = vmul.f32 %v26, 1.442695
    %v30 = vpow.pop %v29
    %v31 = vmul.f32 %v28, %v28
    %v32 = vmul.f32 %v30, %v30
    %v33 = vmul.f32 %v28, 2.0
    %v34 = vmul.f32 %v30, 2.0
    %v35 = vadd.f32 %v31, %v33
    %v36 = vadd.f32 %v32, %v34
    %v37 = vadd.f32 %v35, 2.0
    %v38 = vadd.f32 %v36, 2.0
    %v39 = vrcp.pop %v37
    %v40 = vmul.f32 %v35, %v39
    %v41 = vrcp.pop %v38
    %v42 = vmul.f32 %v36, %v41
    %v43 = vmul.f32 %v23, %v40
    %v44 = vmul.f32 %v24, %v42
    %45 = vst [vmem:[#allocation5] sm:$0xff] %v43
    %46 = vst [vmem:[#allocation5 + $0x8] sm:$0xff] %v44
    // Predicated region
    $region10: #{tpu_custom_call.1} parent=1 // pred_check
      _
    $region11: #{tpu_custom_call.1} parent=1 // pred_check_branch
      %48 = sbr.rel (0) target = $region13
    $region12: #{tpu_custom_call.1} parent=1 // pred_region
      %s50 = ssub.s32 256, 256
      %51 = vsyncadd [#allocation4], %s50
      %s52 = sshll.u32 [#allocation5], 4
      %s53 = int_to_ptr.vmem [resolvable:$true] %s52
      %58 = dma.vmem_to_hbm [thread:$0]  %s53, 256, %s1, [#allocation4], 128, 128, 8
    $region13: #{tpu_custom_call.1} parent=1 // pred_fallthru
      _
    // Predicated region
    $region14: #{tpu_custom_call.1} parent=1 // pred_check
      _
    $region15: #{tpu_custom_call.1} parent=1 // pred_check_branch
      %60 = sbr.rel (0) target = $region17
    $region16: #{tpu_custom_call.1} parent=1 // pred_region
      %61 = dma.done [#allocation4], 256
    $region17: #{tpu_custom_call.1} parent=1 // pred_fallthru
      _
    %62 = vsyncpa [#allocation3], 1
    %63 = vsyncpa [#allocation4], 1

</llo_original>
